<compile_context>
chip_gen: v6e
topology: v6e:2x2x1
jax: 0.10.0
libtpu: 0.0.40
codegen_flags: <defaults>
</compile_context>

<pallas_src>
import functools
import math

import jax
import jax.numpy as jnp
from jax.experimental import pallas as pl
from jax.experimental.pallas import tpu as pltpu


def _round_up(x, m):
    return ((x + m - 1) // m) * m


def _t2v_kernel(a_ref, w_ref, m_ref, o_ref, *, d_features):
    # a_ref: (1, g_tile, pack*(d_mark+1))        packed tau rows + ones (bias) col
    # w_ref: (pack*(d_mark+1), pack*out_w)       block-diag [w0|w ; b0|b], resident
    # m_ref: (1, pack*out_w)                     int32: 1 on linear-trend lanes
    # o_ref: (1, d_features, g_tile, pack*out_w) lane-dense output block
    t = jnp.dot(a_ref[0], w_ref[...], preferred_element_type=jnp.float32)
    # mask==1 (lane % out_w == 0) -> linear trend term (v2); else sine term (v1)
    # (matches torch.cat([v2, v1], -1)).
    row = jnp.where(m_ref[...] != 0, t, jnp.sin(t)).astype(o_ref.dtype)
    # Emit the identical tile for every d_features replica (the torch .repeat);
    # d_features is small and static, so this is a plain unrolled store loop.
    for di in range(d_features):
        o_ref[0, di] = row


def sine_activation_forward(data, tau, w0, b0, w, b, d_features, *,
                            out_dtype=None, vmem_budget_bytes=20 << 20,
                            max_tile_rows=16384):
    """Pallas implementation of SineActivation.forward.

    data: unused by the reference forward (kept for signature parity).
    tau:  (B, d_mark, S)
    w0: (d_mark, 1), b0: (1,), w: (d_mark, out-1), b: (out-1,)
    returns: (B, d_features, S, out_features)
    """
    del data  # the PyTorch forward never uses `data`
    B, d_mark, S = tau.shape
    out_w = 1 + w.shape[1]
    out_dtype = jnp.dtype(out_dtype) if out_dtype is not None else jnp.dtype(tau.dtype)

    # Pack consecutive positions per 128-lane output row (unmasked vst path).
    pack = (128 // out_w) if (out_w <= 128 and 128 % out_w == 0) else 1
    lanes = pack * out_w
    k_in = pack * (d_mark + 1)  # +1: the ones column that carries the bias

    # --- pad S so it packs evenly; padded rows are sliced off at the end -------
    s_pad = _round_up(S, pack)
    G = s_pad // pack

    # --- row-tile sizing from a VMEM budget (lane-padded, double-buffered) -----
    in_row_b = _round_up(k_in, 128) * 4                          # f32 input slab
    out_row_b = d_features * _round_up(lanes, 128) * out_dtype.itemsize
    per_row = 2 * (in_row_b + out_row_b)                         # x2 buffers
    max_rows = max(8, min(max_tile_rows, (vmem_budget_bytes // per_row) // 8 * 8))
    if G <= max_rows:
        n_tiles, g_tile = 1, _round_up(G, 8)
    else:
        n_tiles = math.ceil(G / max_rows)
        g_tile = _round_up(math.ceil(G / n_tiles), 8)
    g_pad = n_tiles * g_tile

    # --- fused trend+periodic weights, bias folded in, replicated per pack slot
    W_full = jnp.concatenate([w0, w], axis=1).astype(jnp.float32)      # (d_mark, out_w)
    bias = jnp.concatenate([b0, b], axis=0).astype(jnp.float32)        # (out_w,)
    W_aug = jnp.concatenate([W_full, bias[None, :]], axis=0)           # (d_mark+1, out_w)
    W_mat = jnp.kron(jnp.eye(pack, dtype=jnp.float32), W_aug)          # (k_in, lanes)
    lane_mask = (jnp.arange(lanes, dtype=jnp.int32) % out_w == 0
                 ).astype(jnp.int32)[None, :]                          # (1, lanes)

    # --- pack tau: tau_A[b, g, r*(d_mark+1)+k] = tau[b, k, g*pack+r]; + ones ---
    tau_f = tau.astype(jnp.float32)
    if s_pad != S:
        tau_f = jnp.pad(tau_f, ((0, 0), (0, 0), (0, s_pad - S)))
    tau_p = jnp.transpose(tau_f.reshape(B, d_mark, G, pack), (0, 2, 3, 1))
    tau_A = jnp.concatenate(
        [tau_p, jnp.ones((B, G, pack, 1), jnp.float32)], axis=-1
    ).reshape(B, G, k_in)
    if g_pad != G:
        tau_A = jnp.pad(tau_A, ((0, 0), (0, g_pad - G), (0, 0)))

    # Explicit VMEM limit from the real (padded) footprint, with headroom,
    # capped well under v7x's 64 MiB physical VMEM.
    const_bytes = 2 * (_round_up(k_in, 8) + 8) * _round_up(lanes, 128) * 4
    footprint = g_tile * per_row + const_bytes
    vmem_limit = int(min(footprint + (4 << 20), 56 << 20))

    kernel = functools.partial(_t2v_kernel, d_features=d_features)

    out_packed = pl.pallas_call(
        kernel,
        out_shape=jax.ShapeDtypeStruct((B, d_features, g_pad, lanes), out_dtype),
        grid_spec=pltpu.PrefetchScalarGridSpec(
            num_scalar_prefetch=0,
            grid=(B, n_tiles),
            in_specs=[
                pl.BlockSpec((1, g_tile, k_in), lambda bi, gi: (bi, gi, 0)),
                pl.BlockSpec((k_in, lanes), lambda bi, gi: (0, 0)),
                pl.BlockSpec((1, lanes), lambda bi, gi: (0, 0)),
            ],
            out_specs=pl.BlockSpec(
                (1, d_features, g_tile, lanes), lambda bi, gi: (bi, 0, gi, 0)
            ),
        ),
        compiler_params=pltpu.CompilerParams(
            dimension_semantics=("parallel", "parallel"),
            vmem_limit_bytes=vmem_limit,
        ),
    )(tau_A, W_mat, lane_mask)

    # Contiguous (free) reshape back to (B, d, S, out); slice off any padding.
    out = out_packed.reshape(B, d_features, g_pad * pack, out_w)
    if g_pad * pack != S:
        out = out[:, :, :S, :]
    return out


if __name__ == "__main__":
    key = jax.random.PRNGKey(0)
    k_tau, k_data, k_w0, k_b0, k_w, k_b = jax.random.split(key, 6)

    # SineActivation(in_features, out_features, d_features, d_mark)
    in_features = 8      # unused by the forward
    out_features = 32
    d_features = 4
    d_mark = 5
    B, S = 2, 256

    # deterministic uniform(-1, 1) init, matching nn.init.uniform_(-1, 1)
    w0 = jax.random.uniform(k_w0, (d_mark, 1), jnp.float32, -1.0, 1.0)
    b0 = jax.random.uniform(k_b0, (1,), jnp.float32, -1.0, 1.0)
    w = jax.random.uniform(k_w, (d_mark, out_features - 1), jnp.float32, -1.0, 1.0)
    b = jax.random.uniform(k_b, (out_features - 1,), jnp.float32, -1.0, 1.0)

    tau = jax.random.normal(k_tau, (B, d_mark, S), jnp.float32)
    data = jax.random.normal(k_data, (B, S, in_features), jnp.float32)  # unused

    out = sine_activation_forward(data, tau, w0, b0, w, b, d_features)
    out = jax.block_until_ready(out)

    # plain-JAX reference (mirrors the PyTorch t2v + unsqueeze/repeat)
    tau_t = jnp.transpose(tau, (0, 2, 1))
    v1 = jnp.sin(jnp.matmul(tau_t, w) + b)
    v2 = jnp.matmul(tau_t, w0) + b0
    ref = jnp.concatenate([v2, v1], axis=-1)
    ref = jnp.broadcast_to(ref[:, None, :, :], (B, d_features, S, out_features))

    assert out.shape == (B, d_features, S, out_features)
    assert jnp.allclose(out, ref, atol=2e-5, rtol=1e-5)
    print("KERNEL_OK")
</pallas_src>

<mosaic_0001>
module attributes {stable_mosaic.version = 11 : i64} {
  func.func @_t2v_kernel(%arg0: i32, %arg1: i32, %arg2: memref<1x64x24xf32, #tpu.memory_space<vmem>>, %arg3: memref<24x128xf32, #tpu.memory_space<vmem>>, %arg4: memref<1x128xi32, #tpu.memory_space<vmem>>, %arg5: memref<1x4x64x128xf32, #tpu.memory_space<vmem>>) attributes {dimension_semantics = [#tpu.dimension_semantics<parallel>, #tpu.dimension_semantics<parallel>], iteration_bounds = array<i64: 2, 1>, scalar_prefetch = 0 : i64, scratch_operands = 0 : i64, tpu.core_type = #tpu.core_type<tc>, window_params = [{transform_indices = @transform_0, window_bounds = array<i64: 1, 64, 24>}, {pipeline_mode = #tpu.pipeline_mode<synchronous>, transform_indices = @transform_1, window_bounds = array<i64: 24, 128>}, {pipeline_mode = #tpu.pipeline_mode<synchronous>, transform_indices = @transform_2, window_bounds = array<i64: 1, 128>}, {transform_indices = @transform_3, window_bounds = array<i64: 1, 4, 64, 128>}]} {
    %c0 = arith.constant 0 : index
    %c0_0 = arith.constant 0 : index
    %c0_1 = arith.constant 0 : index
    %0 = vector.load %arg2[%c0, %c0_0, %c0_1] : memref<1x64x24xf32, #tpu.memory_space<vmem>>, vector<1x64x24xf32>
    %1 = vector.shape_cast %0 : vector<1x64x24xf32> to vector<64x24xf32>
    %c0_2 = arith.constant 0 : index
    %c0_3 = arith.constant 0 : index
    %2 = vector.load %arg3[%c0_2, %c0_3] : memref<24x128xf32, #tpu.memory_space<vmem>>, vector<24x128xf32>
    %cst = arith.constant dense<0.000000e+00> : vector<64x128xf32>
    %3 = tpu.matmul %1, %2, %cst {dimension_numbers = #tpu.dot_dimension_numbers<[1], [0], [0], [1], [0, 0, 1, 1], [], []>} : vector<64x24xf32>, vector<24x128xf32>, vector<64x128xf32> -> vector<64x128xf32>
    %c0_4 = arith.constant 0 : index
    %c0_5 = arith.constant 0 : index
    %4 = vector.load %arg4[%c0_4, %c0_5] : memref<1x128xi32, #tpu.memory_space<vmem>>, vector<1x128xi32>
    %c0_i32 = arith.constant 0 : i32
    %5 = vector.broadcast %c0_i32 : i32 to vector<1x128xi32>
    %6 = arith.cmpi ne, %4, %5 : vector<1x128xi32>
    %7 = math.sin %3 : vector<64x128xf32>
    %8 = vector.shape_cast %6 : vector<1x128xi1> to vector<1x128xi1>
    %9 = vector.broadcast %8 : vector<1x128xi1> to vector<64x128xi1>
    %10 = arith.select %9, %3, %7 : vector<64x128xi1>, vector<64x128xf32>
    %c0_6 = arith.constant 0 : index
    %c0_7 = arith.constant 0 : index
    %c0_8 = arith.constant 0 : index
    %c0_9 = arith.constant 0 : index
    %11 = vector.load %arg5[%c0_6, %c0_7, %c0_8, %c0_9] : memref<1x4x64x128xf32, #tpu.memory_space<vmem>>, vector<1x1x64x128xf32>
    %12 = vector.shape_cast %11 : vector<1x1x64x128xf32> to vector<64x128xf32>
    %13 = vector.shape_cast %10 : vector<64x128xf32> to vector<1x1x64x128xf32>
    tpu.vector_store %arg5[%c0_6, %c0_7, %c0_8, %c0_9], %13 {strides = array<i32>} : memref<1x4x64x128xf32, #tpu.memory_space<vmem>>, vector<1x1x64x128xf32>,
    %c0_10 = arith.constant 0 : index
    %c1 = arith.constant 1 : index
    %c0_11 = arith.constant 0 : index
    %c0_12 = arith.constant 0 : index
    %14 = vector.load %arg5[%c0_10, %c1, %c0_11, %c0_12] : memref<1x4x64x128xf32, #tpu.memory_space<vmem>>, vector<1x1x64x128xf32>
    %15 = vector.shape_cast %14 : vector<1x1x64x128xf32> to vector<64x128xf32>
    %16 = vector.shape_cast %10 : vector<64x128xf32> to vector<1x1x64x128xf32>
    tpu.vector_store %arg5[%c0_10, %c1, %c0_11, %c0_12], %16 {strides = array<i32>} : memref<1x4x64x128xf32, #tpu.memory_space<vmem>>, vector<1x1x64x128xf32>,
    %c0_13 = arith.constant 0 : index
    %c2 = arith.constant 2 : index
    %c0_14 = arith.constant 0 : index
    %c0_15 = arith.constant 0 : index
    %17 = vector.load %arg5[%c0_13, %c2, %c0_14, %c0_15] : memref<1x4x64x128xf32, #tpu.memory_space<vmem>>, vector<1x1x64x128xf32>
    %18 = vector.shape_cast %17 : vector<1x1x64x128xf32> to vector<64x128xf32>
    %19 = vector.shape_cast %10 : vector<64x128xf32> to vector<1x1x64x128xf32>
    tpu.vector_store %arg5[%c0_13, %c2, %c0_14, %c0_15], %19 {strides = array<i32>} : memref<1x4x64x128xf32, #tpu.memory_space<vmem>>, vector<1x1x64x128xf32>,
    %c0_16 = arith.constant 0 : index
    %c3 = arith.constant 3 : index
    %c0_17 = arith.constant 0 : index
    %c0_18 = arith.constant 0 : index
    %20 = vector.load %arg5[%c0_16, %c3, %c0_17, %c0_18] : memref<1x4x64x128xf32, #tpu.memory_space<vmem>>, vector<1x1x64x128xf32>
    %21 = vector.shape_cast %20 : vector<1x1x64x128xf32> to vector<64x128xf32>
    %22 = vector.shape_cast %10 : vector<64x128xf32> to vector<1x1x64x128xf32>
    tpu.vector_store %arg5[%c0_16, %c3, %c0_17, %c0_18], %22 {strides = array<i32>} : memref<1x4x64x128xf32, #tpu.memory_space<vmem>>, vector<1x1x64x128xf32>,
    return
  }
  func.func @transform_0(%arg0: i32, %arg1: i32) -> (i32, i32, i32) {
    %c0_i32 = arith.constant 0 : i32
    %c0_i32_0 = arith.constant 0 : i32
    return %arg0, %arg1, %c0_i32 : i32, i32, i32
  }
  func.func @transform_1(%arg0: i32, %arg1: i32) -> (i32, i32) {
    %c0_i32 = arith.constant 0 : i32
    %c0_i32_0 = arith.constant 0 : i32
    %c0_i32_1 = arith.constant 0 : i32
    return %c0_i32, %c0_i32_0 : i32, i32
  }
  func.func @transform_2(%arg0: i32, %arg1: i32) -> (i32, i32) {
    %c0_i32 = arith.constant 0 : i32
    %c0_i32_0 = arith.constant 0 : i32
    %c0_i32_1 = arith.constant 0 : i32
    return %c0_i32, %c0_i32_0 : i32, i32
  }
  func.func @transform_3(%arg0: i32, %arg1: i32) -> (i32, i32, i32, i32) {
    %c0_i32 = arith.constant 0 : i32
    %c0_i32_0 = arith.constant 0 : i32
    %c0_i32_1 = arith.constant 0 : i32
    return %arg0, %c0_i32, %arg1, %c0_i32_0 : i32, i32, i32, i32
  }
}

</mosaic_0001>

<llo_original>
// kernel: tpu_custom_call.1
$region0: #{tpu_custom_call.1}
  #allocation0 [shape = 'u32[]', space=smem, size = 0x4, offset = 0x4, fixed_abs, tag = 'smem constant byte address 0x4 - core index']
  #allocation1 [shape = 'u32[144,128]{1,0:T(1,128)}', space=vmem, size = 0x12000, scoped, tag = 'internal scratch']
  %s0 = inlined_call_operand.vmem [shape: f32[2,64,24], index: 0, kind: input, shape index: {}]
  %s1 = inlined_call_operand.vmem [shape: f32[24,128], index: 1, kind: input, shape index: {}]
  %s2 = inlined_call_operand.vmem [shape: s32[1,128], index: 2, kind: input, shape index: {}]
  %s3 = inlined_call_operand.hbm [shape: f32[2,4,64,128], index: 3, kind: output, shape index: {}]
  %s4 = sld [smem:[#allocation0]]
  $region45: #{tpu_custom_call.1} parent=0
    _
  %s6 = ssub.s32 1, %s4
  %s7 = scalar_select 0, %s6, %s4
  $region1: #{tpu_custom_call.1} parent=0
    #allocation2 [shape = 'u8[262144]{0}', space=vmem, size = 0x40000, scoped, tag = 'output window, operand 0']
    #allocation3 [shape = 's32[2]{0}', space=sflag, size = 0x8, scoped, tag = 'scoped memory for tpu_custom_call.1']
    %8 = vsyncpa [#allocation3], 0
    %s9 = scalar_lea.sflag [#allocation3], 1
    %10 = vsyncpa %s9, 0
    loop: start=0, step=1, limit=4
    $region2: #{tpu_custom_call.1} parent=1 // loop_pre_header
      _
    $region3: #{tpu_custom_call.1} parent=1 // loop_header
      %s12 = sphi 0, %s16
      %p13 = scmp.ge.s32.totalorder %s12, 4
      %s19 = sphi 0, %s31
      %s20 = sphi 0, %s27
      %s21 = sphi 0, %s19
      %s22 = sphi 0, %s20
      %s23 = sphi 0, %s21
      %s24 = sphi 0, %s22
      %s36 = sphi 0, %s38
      %s39 = sphi 0, %s36
      %s40 = sphi 0, %s39
      %s56 = sphi 0, %s40
      %s60 = sphi 0, %s60
      %s62 = sphi 0, %s60
      %s63 = sphi 0, %s62
      %s77 = sphi 0, %s63
      %s81 = sphi 0, %s81
      %s83 = sphi 0, %s81
      %s84 = sphi 0, %s83
      %s98 = sphi 0, %s84
      %s106 = sphi 0, %s108
      %s109 = sphi 0, %s106
      %s110 = sphi 0, %s109
      %s126 = sphi 0, %s110
    $region4: #{tpu_custom_call.1} parent=1 // loop_header_branch
      %15 = sbr.rel (%p13) target = $region8
    $region5: #{tpu_custom_call.1} parent=1 // loop_body
      %s17 = ssub.s32 %s12, 1
      %s18 = ssub.s32 %s12, 2
      %s25 = sadd.s32 1, %s20
      %p26 = scmp.ge.s32.totalorder %s25, 1
      %s27 = scalar_select %p26, 0, %s25
      %s28 = sadd.s32 1, %s19
      %s29 = scalar_select %p26, %s28, %s19
      %p30 = scmp.ge.s32.totalorder %s29, 2
      %s31 = scalar_select %p30, 0, %s29
      %s32 = ssub.s32 %s19, %s31
      %s33 = ssub.s32 %s20, %s27
      %s34 = sor.u32 %s32, %s33
      %p35 = scmp.eq.s32.totalorder %s34, 0
      %s37 = sadd.s32 %s36, 1
      %s38 = scalar_select %p35, %s36, %s37
      %p41 = pneg %p35
      %p42 = scmp.eq.s32.totalorder %s12, 1
      %p43 = por %p41, %p42
      %p44 = scmp.ne.s32.totalorder %s36, %s39
      %p45 = scmp.eq.s32.totalorder %s12, 0
      %p46 = por %p44, %p45
      %p47 = scmp.ne.s32.totalorder %s36, %s39
      %p48 = scmp.eq.s32.totalorder %s17, 1
      %p49 = por %p47, %p48
      %p50 = scmp.ne.s32.totalorder %s39, %s40
      %p51 = scmp.eq.s32.totalorder %s17, 0
      %p52 = por %p50, %p51
      %p53 = scmp.ne.s32.totalorder %s39, %s40
      %p54 = scmp.eq.s32.totalorder %s18, 1
      %p55 = por %p53, %p54
      %p57 = scmp.ne.s32.totalorder %s40, %s56
      %p58 = scmp.eq.s32.totalorder %s18, 0
      %p59 = por %p57, %p58
      %s61 = sadd.s32 %s60, 1
      %p64 = scmp.eq.s32.totalorder %s12, 1
      %p65 = scmp.ne.s32.totalorder %s60, %s62
      %p66 = scmp.eq.s32.totalorder %s12, 0
      %p67 = por %p65, %p66
      %p68 = scmp.ne.s32.totalorder %s60, %s62
      %p69 = scmp.eq.s32.totalorder %s17, 1
      %p70 = por %p68, %p69
      %p71 = scmp.ne.s32.totalorder %s62, %s63
      %p72 = scmp.eq.s32.totalorder %s17, 0
      %p73 = por %p71, %p72
      %p74 = scmp.ne.s32.totalorder %s62, %s63
      %p75 = scmp.eq.s32.totalorder %s18, 1
      %p76 = por %p74, %p75
      %p78 = scmp.ne.s32.totalorder %s63, %s77
      %p79 = scmp.eq.s32.totalorder %s18, 0
      %p80 = por %p78, %p79
      %s82 = sadd.s32 %s81, 1
      %p85 = scmp.eq.s32.totalorder %s12, 1
      %p86 = scmp.ne.s32.totalorder %s81, %s83
      %p87 = scmp.eq.s32.totalorder %s12, 0
      %p88 = por %p86, %p87
      %p89 = scmp.ne.s32.totalorder %s81, %s83
      %p90 = scmp.eq.s32.totalorder %s17, 1
      %p91 = por %p89, %p90
      %p92 = scmp.ne.s32.totalorder %s83, %s84
      %p93 = scmp.eq.s32.totalorder %s17, 0
      %p94 = por %p92, %p93
      %p95 = scmp.ne.s32.totalorder %s83, %s84
      %p96 = scmp.eq.s32.totalorder %s18, 1
      %p97 = por %p95, %p96
      %p99 = scmp.ne.s32.totalorder %s84, %s98
      %p100 = scmp.eq.s32.totalorder %s18, 0
      %p101 = por %p99, %p100
      %s102 = ssub.s32 %s19, %s31
      %s103 = ssub.s32 %s20, %s27
      %s104 = sor.u32 %s102, %s103
      %p105 = scmp.eq.s32.totalorder %s104, 0
      %s107 = sadd.s32 %s106, 1
      %s108 = scalar_select %p105, %s106, %s107
      %p111 = pneg %p105
      %p112 = scmp.eq.s32.totalorder %s12, 1
      %p113 = por %p111, %p112
      %p114 = scmp.ne.s32.totalorder %s106, %s109
      %p115 = scmp.eq.s32.totalorder %s12, 0
      %p116 = por %p114, %p115
      %p117 = scmp.ne.s32.totalorder %s106, %s109
      %p118 = scmp.eq.s32.totalorder %s17, 1
      %p119 = por %p117, %p118
      %p120 = scmp.ne.s32.totalorder %s109, %s110
      %p121 = scmp.eq.s32.totalorder %s17, 0
      %p122 = por %p120, %p121
      %p123 = scmp.ne.s32.totalorder %s109, %s110
      %p124 = scmp.eq.s32.totalorder %s18, 1
      %p125 = por %p123, %p124
      %p127 = scmp.ne.s32.totalorder %s110, %s126
      %p128 = scmp.eq.s32.totalorder %s18, 0
      %p129 = por %p127, %p128
      %p130 = scmp.le.s32.totalorder 1, %s12
      %p131 = scmp.lt.s32.totalorder %s12, 3
      %p132 = pnand %p130, %p131
      %p133 = pneg %p132
      // Predicated region
      $region9: #{tpu_custom_call.1} parent=5 // pred_check
        _
      $region10: #{tpu_custom_call.1} parent=5 // pred_check_branch
        %135 = sbr.rel (%p132) target = $region12
      $region11: #{tpu_custom_call.1} parent=5 // pred_region
        %s136 = ssub.s32 %s12, 1
        // Predicated region
        $region13: #{tpu_custom_call.1} parent=11 // pred_check
          %p137 = pneg %p73
        $region14: #{tpu_custom_call.1} parent=11 // pred_check_branch
          %139 = sbr.rel (%p137) target = $region16
        $region15: #{tpu_custom_call.1} parent=11 // pred_region
          _
        $region16: #{tpu_custom_call.1} parent=11 // pred_fallthru
          _
        // Predicated region
        $region17: #{tpu_custom_call.1} parent=11 // pred_check
          %p140 = pneg %p94
        $region18: #{tpu_custom_call.1} parent=11 // pred_check_branch
          %142 = sbr.rel (%p140) target = $region20
        $region19: #{tpu_custom_call.1} parent=11 // pred_region
          _
        $region20: #{tpu_custom_call.1} parent=11 // pred_fallthru
          _
      $region12: #{tpu_custom_call.1} parent=5 // pred_fallthru
        _
      %p143 = scmp.lt.s32.totalorder %s12, 2
      // Predicated region
      $region21: #{tpu_custom_call.1} parent=5 // pred_check
        %p144 = pneg %p143
      $region22: #{tpu_custom_call.1} parent=5 // pred_check_branch
        %146 = sbr.rel (%p144) target = $region24
      $region23: #{tpu_custom_call.1} parent=5 // pred_region
        // Predicated region
        $region25: #{tpu_custom_call.1} parent=23 // pred_check
          %p147 = pneg %p46
        $region26: #{tpu_custom_call.1} parent=23 // pred_check_branch
          %149 = sbr.rel (%p147) target = $region28
        $region27: #{tpu_custom_call.1} parent=23 // pred_region
          %s150 = smul.u32 8, %s20
          %p151 = scmp.lt.s32.totalorder %s19, 1
          %s152 = scalar_select %p151, %s19, 1
          %p153 = scmp.lt.s32.totalorder %s150, 7
          %s154 = scalar_select %p153, %s150, 7
          %s155 = smul.addr %s152, 8
          %s156 = sadd.s32 %s154, %s155
          %s157 = smul.addr %s156, 8
          %s158 = scalar_lea.vmem %s0, %s157
          %s159 = smul.u32 8, %s20
        $region28: #{tpu_custom_call.1} parent=23 // pred_fallthru
          _
      $region24: #{tpu_custom_call.1} parent=5 // pred_fallthru
        _
      %p160 = scmp.le.s32.totalorder 1, %s12
      %p161 = scmp.lt.s32.totalorder %s12, 3
      %p162 = pnand %p160, %p161
      %p163 = pneg %p162
      // Predicated region
      $region29: #{tpu_custom_call.1} parent=5 // pred_check
        _
      $region30: #{tpu_custom_call.1} parent=5 // pred_check_branch
        %165 = sbr.rel (%p162) target = $region32
      $region31: #{tpu_custom_call.1} parent=5 // pred_region
        %s166 = ssub.s32 %s12, 1
        %s167 = smul.u32 8, %s22
        %p168 = scmp.lt.s32.totalorder %s21, 1
        %s169 = scalar_select %p168, %s21, 1
        %p170 = scmp.lt.s32.totalorder %s167, 7
        %s171 = scalar_select %p170, %s167, 7
        %s172 = smul.addr %s169, 8
        %s173 = sadd.s32 %s171, %s172
        %s174 = smul.addr %s173, 8
        %s175 = scalar_lea.vmem %s0, %s174
        %p176 = pneg %p52
        %p177 = pneg %p49
        %p178 = pneg %p73
        %p179 = pneg %p70
        %p180 = pneg %p94
        %p181 = pneg %p91
        %p182 = pneg %p122
        %p183 = pneg %p119
        %s184 = sand.u32 %s109, 1
        %s185 = scalar_lea.sflag [#allocation3], %s184
        %s186 = sand.u32 %s109, 1
        %s187 = smul.addr %s186, 256
        %s188 = scalar_lea.vmem [#allocation2], %s187
        %s189 = smul.u32 8, %s22
        %p190 = scmp.lt.s32.totalorder %s21, 1
        %s191 = scalar_select %p190, %s21, 1
        %p192 = scmp.lt.s32.totalorder %s189, 7
        %s193 = scalar_select %p192, %s189, 7
        %s194 = smul.addr %s191, 8
        %s195 = sadd.s32 %s193, %s194
        %s196 = smul.addr %s195, 8
        %s197 = scalar_lea.vmem %s0, %s196
        %s198 = smul.u32 8, %s22
        %s199 = smul.u32 8, %s22
        %v200 = vld [vmem:[%s197] sm:$0xff]
        %v201 = vld [vmem:[%s197 + $0x8] sm:$0xff]
        %v202 = vld [vmem:[%s197 + $0x10] sm:$0xff]
        %v203 = vld [vmem:[%s197 + $0x18] sm:$0xff]
        %v204 = vld [vmem:[%s197 + $0x20] sm:$0xff]
        %v205 = vld [vmem:[%s197 + $0x28] sm:$0xff]
        %v206 = vld [vmem:[%s197 + $0x30] sm:$0xff]
        %v207 = vld [vmem:[%s197 + $0x38] sm:$0xff]
        %v208 = vld [vmem:[%s1] sm:$0xff]
        %v209 = vld [vmem:[%s1 + $0x8] sm:$0xff]
        %v210 = vld [vmem:[%s1 + $0x10] sm:$0xff]
        %vm211 = vcmask 195584
        %v213 = vsel %vm211, %v200, 0
        %v216 = vsel %vm211, %v201, 0
        %v219 = vsel %vm211, %v202, 0
        %v222 = vsel %vm211, %v203, 0
        %v225 = vsel %vm211, %v204, 0
        %v228 = vsel %vm211, %v205, 0
        %v231 = vsel %vm211, %v206, 0
        %v234 = vsel %vm211, %v207, 0
        %236 = vmatprep.subr.mxu0 0.0
        %237 = vmatpush1.msra.mxu0 0.0
        %238 = vmatprep.subr.mxu0 0.0
        %239 = vmatpush1.msra.mxu0 0.0
        %240 = vmatprep.subr.mxu0 0.0
        %241 = vmatpush1.msra.mxu0 0.0
        %242 = vmatprep.subr.mxu0 0.0
        %243 = vmatpush1.msra.mxu0 0.0
        %244 = vmatprep.subr.mxu0 0.0
        %245 = vmatpush1.msra.mxu0 0.0
        %246 = vmatprep.subr.mxu0 0.0
        %247 = vmatpush1.msra.mxu0 0.0
        %248 = vmatprep.subr.mxu0 0.0
        %249 = vmatpush1.msra.mxu0 0.0
        %250 = vmatprep.subr.mxu0 0.0
        %251 = vmatpush1.msra.mxu0 0.0
        %252 = vmatprep.subr.mxu0 0.0
        %253 = vmatpush1.msra.mxu0 0.0
        %254 = vmatprep.subr.mxu0 0.0
        %255 = vmatpush1.msra.mxu0 0.0
        %256 = vmatprep.subr.mxu0 0.0
        %257 = vmatpush1.msra.mxu0 0.0
        %258 = vmatprep.subr.mxu0 0.0
        %259 = vmatpush1.msra.mxu0 0.0
        %260 = vmatprep.subr.mxu0 0.0
        %261 = vmatpush1.msra.mxu0 0.0
        %262 = vmatprep.subr.mxu0 0.0
        %263 = vmatpush1.msra.mxu0 %v210
        %264 = vmatprep.subr.mxu0 0.0
        %265 = vmatpush1.msra.mxu0 %v209
        %266 = vmatprep.subr.mxu0 0.0
        %267 = vmatpush1.msra.mxu0 %v208
        %268 = vmatprep.subr.mxu0 0.0
        %269 = vmatpush2.msra.mxu0 0.0
        %270 = vmatprep.subr.mxu0 0.0
        %271 = vmatpush2.msra.mxu0 0.0
        %272 = vmatprep.subr.mxu0 0.0
        %273 = vmatpush2.msra.mxu0 0.0
        %274 = vmatprep.subr.mxu0 0.0
        %275 = vmatpush2.msra.mxu0 0.0
        %276 = vmatprep.subr.mxu0 0.0
        %277 = vmatpush2.msra.mxu0 0.0
        %278 = vmatprep.subr.mxu0 0.0
        %279 = vmatpush2.msra.mxu0 0.0
        %280 = vmatprep.subr.mxu0 0.0
        %281 = vmatpush2.msra.mxu0 0.0
        %282 = vmatprep.subr.mxu0 0.0
        %283 = vmatpush2.msra.mxu0 0.0
        %284 = vmatprep.subr.mxu0 0.0
        %285 = vmatpush2.msra.mxu0 0.0
        %286 = vmatprep.subr.mxu0 0.0
        %287 = vmatpush2.msra.mxu0 0.0
        %288 = vmatprep.subr.mxu0 0.0
        %289 = vmatpush2.msra.mxu0 0.0
        %290 = vmatprep.subr.mxu0 0.0
        %291 = vmatpush2.msra.mxu0 0.0
        %292 = vmatprep.subr.mxu0 0.0
        %293 = vmatpush2.msra.mxu0 0.0
        %294 = vmatprep.subr.mxu0 0.0
        %295 = vmatpush2.msra.mxu0 0.0
        %296 = vmatprep.subr.mxu0 0.0
        %297 = vmatpush2.msra.mxu0 0.0
        %298 = vmatprep.subr.mxu0 0.0
        %299 = vmatpush2.msra.mxu0 0.0
        %300 = vmatprep.mubr.f32.mxu0 0.0
        %301 = vmatmul.mubr.f32.gmra.mxu0 %v213
        %v302 = vpop.f32.mrf.mxu0
        %v303 = vadd.f32 0.0, %v302
        %v304 = vpop.f32.mrf.mxu0
        %305 = vmatprep.mubr.f32.mxu0 0.0
        %306 = vmatmul.mubr.f32.gmra.mxu0 %v216
        %v307 = vpop.f32.mrf.mxu0
        %v308 = vadd.f32 0.0, %v307
        %v309 = vpop.f32.mrf.mxu0
        %310 = vmatprep.mubr.f32.mxu0 0.0
        %311 = vmatmul.mubr.f32.gmra.mxu0 %v219
        %v312 = vpop.f32.mrf.mxu0
        %v313 = vadd.f32 0.0, %v312
        %v314 = vpop.f32.mrf.mxu0
        %315 = vmatprep.mubr.f32.mxu0 0.0
        %316 = vmatmul.mubr.f32.gmra.mxu0 %v222
        %v317 = vpop.f32.mrf.mxu0
        %v318 = vadd.f32 0.0, %v317
        %v319 = vpop.f32.mrf.mxu0
        %320 = vmatprep.mubr.f32.mxu0 0.0
        %321 = vmatmul.mubr.f32.gmra.mxu0 %v225
        %v322 = vpop.f32.mrf.mxu0
        %v323 = vadd.f32 0.0, %v322
        %v324 = vpop.f32.mrf.mxu0
        %325 = vmatprep.mubr.f32.mxu0 0.0
        %326 = vmatmul.mubr.f32.gmra.mxu0 %v228
        %v327 = vpop.f32.mrf.mxu0
        %v328 = vadd.f32 0.0, %v327
        %v329 = vpop.f32.mrf.mxu0
        %330 = vmatprep.mubr.f32.mxu0 0.0
        %331 = vmatmul.mubr.f32.gmra.mxu0 %v231
        %v332 = vpop.f32.mrf.mxu0
        %v333 = vadd.f32 0.0, %v332
        %v334 = vpop.f32.mrf.mxu0
        %335 = vmatprep.mubr.f32.mxu0 0.0
        %336 = vmatmul.mubr.f32.gmra.mxu0 %v234
        %v337 = vpop.f32.mrf.mxu0
        %v338 = vadd.f32 0.0, %v337
        %v339 = vpop.f32.mrf.mxu0
        %340 = vdwg.mxu0
        %v341 = vld [vmem:[%s2] sm:$0x1]
        %vm342 = vcmp.ne.s32.totalorder %v341, 0
        %v343 = vand.u32 2147483647, %v303
        %vm344 = vcmp.le.f32.partialorder %v343, 0.7853982
        %vm345 = vcmp.lt.s32.totalorder %v303, 0
        %v346 = vand.u32 %v303, 2139095040
        %v347 = vshrl.u32 %v346, 23
        %v348 = vsub.s32 %v347, 127
        %v349 = vand.u32 2147483647, %v303
        %v350 = vand.u32 %v349, 8388607
        %v351 = vor.u32 %v350, 8388608
        %v352 = vsub.s32 0, %v351
        %v353 = vadd.s32 %v348, 1
        %vm354 = vcmp.gt.s32.totalorder %v353, 0
        %v355 = vsel %vm354, %v353, 0
        %v356 = vshrl.u32 %v355, 5
        %v357 = vand.u32 %v355, 31
        %v358 = vsub.s32 32, %v357
        %v359 = vshrl.u32 683565275, %v358
        %v360 = vshll.u32 683565275, %v357
        %v361 = vshrl.u32 2475754826, %v358
        %v362 = vor.u32 %v360, %v361
        %v363 = vshll.u32 2475754826, %v357
        %v364 = vshrl.u32 2131351028, %v358
        %v365 = vor.u32 %v363, %v364
        %v366 = vshll.u32 2131351028, %v357
        %v367 = vshrl.u32 2102212464, %v358
        %v368 = vor.u32 %v366, %v367
        %v369 = vshll.u32 2102212464, %v357
        %v370 = vshrl.u32 920167782, %v358
        %v371 = vor.u32 %v369, %v370
        %v372 = vshll.u32 920167782, %v357
        %v373 = vshrl.u32 1326507024, %v358
        %v374 = vor.u32 %v372, %v373
        %vm375 = vcmp.lt.s32.totalorder %v356, 1
        %vm376 = vcmp.lt.s32.totalorder %v356, 2
        %vm377 = vcmp.lt.s32.totalorder %v356, 3
        %vm378 = vcmp.lt.s32.totalorder %v356, 4
        %v379 = vsel %vm375, %v359, %v362
        %v380 = vsel %vm378, %v368, 2102212464
        %v381 = vsel %vm377, %v365, %v380
        %v382 = vsel %vm376, %v379, %v381
        %v383 = vsel %vm375, %v362, %v365
        %v384 = vsel %vm378, %v371, 920167782
        %v385 = vsel %vm377, %v368, %v384
        %v386 = vsel %vm376, %v383, %v385
        %v387 = vsel %vm375, %v365, %v368
        %v388 = vsel %vm378, %v374, 1326507024
        %v389 = vsel %vm377, %v371, %v388
        %v390 = vsel %vm376, %v387, %v389
        %v391 = vshll.u32 %v351, 8
        %v392 = vmul.u32.u64.compose %v391, %v390
        %v393 = vextract.low.u32 %v392
        %v394 = vextract.high.u32 %v392
        %v395 = vmul.u32.u64.compose %v391, %v386
        %v396 = vextract.low.u32 %v395
        %v397 = vextract.high.u32 %v395
        %v398 = vmul.u32 %v391, %v382
        %v399 = vadd.s32 %v394, %v396
        %vm400 = vc.u32 %v394, %v396
        %v401 = vadd.s32 %v397, 1
        %v402 = vsel %vm400, %v401, %v397
        %v403 = vadd.s32 %v398, %v402
        %v404 = vadd.s32 %v403, 536870912
        %v405 = vshrl.u32 %v404, 30
        %v406 = vshll.u32 %v405, 30
        %v407 = vsub.s32 %v403, %v406
        %vm408 = vcmp.lt.s32.totalorder %v407, 0
        %v409 = vsub.s32 0, %v407
        %v410 = vsel %vm408, %v409, %v407
        %v411 = vclz %v410
        %v412 = vsub.s32 %v411, 2
        %vm413 = vcmp.gt.s32.totalorder 0, %v412
        %v414 = vsel %vm413, 0, %v412
        %v415 = vsub.s32 32, %v414
        %v416 = vshll.u32 %v407, %v414
        %v417 = vshrl.u32 %v399, %v415
        %v418 = vor.u32 %v416, %v417
        %v419 = vsub.s32 4294967266, %v414
        %v420 = vadd.s32 %v419, 127
        %v421 = vshll.u32 %v420, 23
        %v422 = vor.u32 4788187, %v421
        %v423 = vand.u32 2147483647, %v422
        %v425 = vcvt.s32.f32 %v418
        %v426 = vmul.f32 %v425, %v423
        %v427 = vxor.u32 %v426, 2147483648
        %v428 = vsel %vm345, %v427, %v426
        %v429 = vsub.s32 4, %v405
        %v430 = vsel %vm345, %v429, %v405
        %v431 = vsel %vm344, %v303, %v428
        %v432 = vsel %vm344, 0, %v430
        %v433 = vcosq.f32.pop %v431
        %v434 = vsinq.f32.pop %v431
        %vm435 = vweird.f32 %v303
        %v436 = vadd.s32 %v432, 3
        %v437 = vand.u32 %v436, 3
        %vm438 = vcmp.lt.s32.totalorder %v437, 2
        %vm439 = vcmp.eq.s32.totalorder %v437, 0
        %v440 = vxor.u32 %v434, 2147483648
        %v441 = vsel %vm439, %v433, %v440
        %vm442 = vcmp.eq.s32.totalorder %v437, 2
        %v443 = vxor.u32 %v433, 2147483648
        %v444 = vsel %vm442, %v443, %v434
        %v445 = vsel %vm438, %v441, %v444
        %v446 = vsel %vm435, nan, %v445
        %v447 = vand.u32 2147483647, %v308
        %vm448 = vcmp.le.f32.partialorder %v447, 0.7853982
        %vm449 = vcmp.lt.s32.totalorder %v308, 0
        %v450 = vand.u32 %v308, 2139095040
        %v451 = vshrl.u32 %v450, 23
        %v452 = vsub.s32 %v451, 127
        %v453 = vand.u32 2147483647, %v308
        %v454 = vand.u32 %v453, 8388607
        %v455 = vor.u32 %v454, 8388608
        %v456 = vsub.s32 0, %v455
        %v457 = vadd.s32 %v452, 1
        %vm458 = vcmp.gt.s32.totalorder %v457, 0
        %v459 = vsel %vm458, %v457, 0
        %v460 = vshrl.u32 %v459, 5
        %v461 = vand.u32 %v459, 31
        %v462 = vsub.s32 32, %v461
        %v463 = vshrl.u32 683565275, %v462
        %v464 = vshll.u32 683565275, %v461
        %v465 = vshrl.u32 2475754826, %v462
        %v466 = vor.u32 %v464, %v465
        %v467 = vshll.u32 2475754826, %v461
        %v468 = vshrl.u32 2131351028, %v462
        %v469 = vor.u32 %v467, %v468
        %v470 = vshll.u32 2131351028, %v461
        %v471 = vshrl.u32 2102212464, %v462
        %v472 = vor.u32 %v470, %v471
        %v473 = vshll.u32 2102212464, %v461
        %v474 = vshrl.u32 920167782, %v462
        %v475 = vor.u32 %v473, %v474
        %v476 = vshll.u32 920167782, %v461
        %v477 = vshrl.u32 1326507024, %v462
        %v478 = vor.u32 %v476, %v477
        %vm479 = vcmp.lt.s32.totalorder %v460, 1
        %vm480 = vcmp.lt.s32.totalorder %v460, 2
        %vm481 = vcmp.lt.s32.totalorder %v460, 3
        %vm482 = vcmp.lt.s32.totalorder %v460, 4
        %v483 = vsel %vm479, %v463, %v466
        %v484 = vsel %vm482, %v472, 2102212464
        %v485 = vsel %vm481, %v469, %v484
        %v486 = vsel %vm480, %v483, %v485
        %v487 = vsel %vm479, %v466, %v469
        %v488 = vsel %vm482, %v475, 920167782
        %v489 = vsel %vm481, %v472, %v488
        %v490 = vsel %vm480, %v487, %v489
        %v491 = vsel %vm479, %v469, %v472
        %v492 = vsel %vm482, %v478, 1326507024
        %v493 = vsel %vm481, %v475, %v492
        %v494 = vsel %vm480, %v491, %v493
        %v495 = vshll.u32 %v455, 8
        %v496 = vmul.u32.u64.compose %v495, %v494
        %v497 = vextract.low.u32 %v496
        %v498 = vextract.high.u32 %v496
        %v499 = vmul.u32.u64.compose %v495, %v490
        %v500 = vextract.low.u32 %v499
        %v501 = vextract.high.u32 %v499
        %v502 = vmul.u32 %v495, %v486
        %v503 = vadd.s32 %v498, %v500
        %vm504 = vc.u32 %v498, %v500
        %v505 = vadd.s32 %v501, 1
        %v506 = vsel %vm504, %v505, %v501
        %v507 = vadd.s32 %v502, %v506
        %v508 = vadd.s32 %v507, 536870912
        %v509 = vshrl.u32 %v508, 30
        %v510 = vshll.u32 %v509, 30
        %v511 = vsub.s32 %v507, %v510
        %vm512 = vcmp.lt.s32.totalorder %v511, 0
        %v513 = vsub.s32 0, %v511
        %v514 = vsel %vm512, %v513, %v511
        %v515 = vclz %v514
        %v516 = vsub.s32 %v515, 2
        %vm517 = vcmp.gt.s32.totalorder 0, %v516
        %v518 = vsel %vm517, 0, %v516
        %v519 = vsub.s32 32, %v518
        %v520 = vshll.u32 %v511, %v518
        %v521 = vshrl.u32 %v503, %v519
        %v522 = vor.u32 %v520, %v521
        %v523 = vsub.s32 4294967266, %v518
        %v524 = vadd.s32 %v523, 127
        %v525 = vshll.u32 %v524, 23
        %v526 = vor.u32 4788187, %v525
        %v527 = vand.u32 2147483647, %v526
        %v529 = vcvt.s32.f32 %v522
        %v530 = vmul.f32 %v529, %v527
        %v531 = vxor.u32 %v530, 2147483648
        %v532 = vsel %vm449, %v531, %v530
        %v533 = vsub.s32 4, %v509
        %v534 = vsel %vm449, %v533, %v509
        %v535 = vsel %vm448, %v308, %v532
        %v536 = vsel %vm448, 0, %v534
        %v537 = vcosq.f32.pop %v535
        %v538 = vsinq.f32.pop %v535
        %vm539 = vweird.f32 %v308
        %v540 = vadd.s32 %v536, 3
        %v541 = vand.u32 %v540, 3
        %vm542 = vcmp.lt.s32.totalorder %v541, 2
        %vm543 = vcmp.eq.s32.totalorder %v541, 0
        %v544 = vxor.u32 %v538, 2147483648
        %v545 = vsel %vm543, %v537, %v544
        %vm546 = vcmp.eq.s32.totalorder %v541, 2
        %v547 = vxor.u32 %v537, 2147483648
        %v548 = vsel %vm546, %v547, %v538
        %v549 = vsel %vm542, %v545, %v548
        %v550 = vsel %vm539, nan, %v549
        %v551 = vand.u32 2147483647, %v313
        %vm552 = vcmp.le.f32.partialorder %v551, 0.7853982
        %vm553 = vcmp.lt.s32.totalorder %v313, 0
        %v554 = vand.u32 %v313, 2139095040
        %v555 = vshrl.u32 %v554, 23
        %v556 = vsub.s32 %v555, 127
        %v557 = vand.u32 2147483647, %v313
        %v558 = vand.u32 %v557, 8388607
        %v559 = vor.u32 %v558, 8388608
        %v560 = vsub.s32 0, %v559
        %v561 = vadd.s32 %v556, 1
        %vm562 = vcmp.gt.s32.totalorder %v561, 0
        %v563 = vsel %vm562, %v561, 0
        %v564 = vshrl.u32 %v563, 5
        %v565 = vand.u32 %v563, 31
        %v566 = vsub.s32 32, %v565
        %v567 = vshrl.u32 683565275, %v566
        %v568 = vshll.u32 683565275, %v565
        %v569 = vshrl.u32 2475754826, %v566
        %v570 = vor.u32 %v568, %v569
        %v571 = vshll.u32 2475754826, %v565
        %v572 = vshrl.u32 2131351028, %v566
        %v573 = vor.u32 %v571, %v572
        %v574 = vshll.u32 2131351028, %v565
        %v575 = vshrl.u32 2102212464, %v566
        %v576 = vor.u32 %v574, %v575
        %v577 = vshll.u32 2102212464, %v565
        %v578 = vshrl.u32 920167782, %v566
        %v579 = vor.u32 %v577, %v578
        %v580 = vshll.u32 920167782, %v565
        %v581 = vshrl.u32 1326507024, %v566
        %v582 = vor.u32 %v580, %v581
        %vm583 = vcmp.lt.s32.totalorder %v564, 1
        %vm584 = vcmp.lt.s32.totalorder %v564, 2
        %vm585 = vcmp.lt.s32.totalorder %v564, 3
        %vm586 = vcmp.lt.s32.totalorder %v564, 4
        %v587 = vsel %vm583, %v567, %v570
        %v588 = vsel %vm586, %v576, 2102212464
        %v589 = vsel %vm585, %v573, %v588
        %v590 = vsel %vm584, %v587, %v589
        %v591 = vsel %vm583, %v570, %v573
        %v592 = vsel %vm586, %v579, 920167782
        %v593 = vsel %vm585, %v576, %v592
        %v594 = vsel %vm584, %v591, %v593
        %v595 = vsel %vm583, %v573, %v576
        %v596 = vsel %vm586, %v582, 1326507024
        %v597 = vsel %vm585, %v579, %v596
        %v598 = vsel %vm584, %v595, %v597
        %v599 = vshll.u32 %v559, 8
        %v600 = vmul.u32.u64.compose %v599, %v598
        %v601 = vextract.low.u32 %v600
        %v602 = vextract.high.u32 %v600
        %v603 = vmul.u32.u64.compose %v599, %v594
        %v604 = vextract.low.u32 %v603
        %v605 = vextract.high.u32 %v603
        %v606 = vmul.u32 %v599, %v590
        %v607 = vadd.s32 %v602, %v604
        %vm608 = vc.u32 %v602, %v604
        %v609 = vadd.s32 %v605, 1
        %v610 = vsel %vm608, %v609, %v605
        %v611 = vadd.s32 %v606, %v610
        %v612 = vadd.s32 %v611, 536870912
        %v613 = vshrl.u32 %v612, 30
        %v614 = vshll.u32 %v613, 30
        %v615 = vsub.s32 %v611, %v614
        %vm616 = vcmp.lt.s32.totalorder %v615, 0
        %v617 = vsub.s32 0, %v615
        %v618 = vsel %vm616, %v617, %v615
        %v619 = vclz %v618
        %v620 = vsub.s32 %v619, 2
        %vm621 = vcmp.gt.s32.totalorder 0, %v620
        %v622 = vsel %vm621, 0, %v620
        %v623 = vsub.s32 32, %v622
        %v624 = vshll.u32 %v615, %v622
        %v625 = vshrl.u32 %v607, %v623
        %v626 = vor.u32 %v624, %v625
        %v627 = vsub.s32 4294967266, %v622
        %v628 = vadd.s32 %v627, 127
        %v629 = vshll.u32 %v628, 23
        %v630 = vor.u32 4788187, %v629
        %v631 = vand.u32 2147483647, %v630
        %v633 = vcvt.s32.f32 %v626
        %v634 = vmul.f32 %v633, %v631
        %v635 = vxor.u32 %v634, 2147483648
        %v636 = vsel %vm553, %v635, %v634
        %v637 = vsub.s32 4, %v613
        %v638 = vsel %vm553, %v637, %v613
        %v639 = vsel %vm552, %v313, %v636
        %v640 = vsel %vm552, 0, %v638
        %v641 = vcosq.f32.pop %v639
        %v642 = vsinq.f32.pop %v639
        %vm643 = vweird.f32 %v313
        %v644 = vadd.s32 %v640, 3
        %v645 = vand.u32 %v644, 3
        %vm646 = vcmp.lt.s32.totalorder %v645, 2
        %vm647 = vcmp.eq.s32.totalorder %v645, 0
        %v648 = vxor.u32 %v642, 2147483648
        %v649 = vsel %vm647, %v641, %v648
        %vm650 = vcmp.eq.s32.totalorder %v645, 2
        %v651 = vxor.u32 %v641, 2147483648
        %v652 = vsel %vm650, %v651, %v642
        %v653 = vsel %vm646, %v649, %v652
        %v654 = vsel %vm643, nan, %v653
        %v655 = vand.u32 2147483647, %v318
        %vm656 = vcmp.le.f32.partialorder %v655, 0.7853982
        %vm657 = vcmp.lt.s32.totalorder %v318, 0
        %v658 = vand.u32 %v318, 2139095040
        %v659 = vshrl.u32 %v658, 23
        %v660 = vsub.s32 %v659, 127
        %v661 = vand.u32 2147483647, %v318
        %v662 = vand.u32 %v661, 8388607
        %v663 = vor.u32 %v662, 8388608
        %v664 = vsub.s32 0, %v663
        %v665 = vadd.s32 %v660, 1
        %vm666 = vcmp.gt.s32.totalorder %v665, 0
        %v667 = vsel %vm666, %v665, 0
        %v668 = vshrl.u32 %v667, 5
        %v669 = vand.u32 %v667, 31
        %v670 = vsub.s32 32, %v669
        %v671 = vshrl.u32 683565275, %v670
        %v672 = vshll.u32 683565275, %v669
        %v673 = vshrl.u32 2475754826, %v670
        %v674 = vor.u32 %v672, %v673
        %v675 = vshll.u32 2475754826, %v669
        %v676 = vshrl.u32 2131351028, %v670
        %v677 = vor.u32 %v675, %v676
        %v678 = vshll.u32 2131351028, %v669
        %v679 = vshrl.u32 2102212464, %v670
        %v680 = vor.u32 %v678, %v679
        %v681 = vshll.u32 2102212464, %v669
        %v682 = vshrl.u32 920167782, %v670
        %v683 = vor.u32 %v681, %v682
        %v684 = vshll.u32 920167782, %v669
        %v685 = vshrl.u32 1326507024, %v670
        %v686 = vor.u32 %v684, %v685
        %vm687 = vcmp.lt.s32.totalorder %v668, 1
        %vm688 = vcmp.lt.s32.totalorder %v668, 2
        %vm689 = vcmp.lt.s32.totalorder %v668, 3
        %vm690 = vcmp.lt.s32.totalorder %v668, 4
        %v691 = vsel %vm687, %v671, %v674
        %v692 = vsel %vm690, %v680, 2102212464
        %v693 = vsel %vm689, %v677, %v692
        %v694 = vsel %vm688, %v691, %v693
        %v695 = vsel %vm687, %v674, %v677
        %v696 = vsel %vm690, %v683, 920167782
        %v697 = vsel %vm689, %v680, %v696
        %v698 = vsel %vm688, %v695, %v697
        %v699 = vsel %vm687, %v677, %v680
        %v700 = vsel %vm690, %v686, 1326507024
        %v701 = vsel %vm689, %v683, %v700
        %v702 = vsel %vm688, %v699, %v701
        %v703 = vshll.u32 %v663, 8
        %v704 = vmul.u32.u64.compose %v703, %v702
        %v705 = vextract.low.u32 %v704
        %v706 = vextract.high.u32 %v704
        %v707 = vmul.u32.u64.compose %v703, %v698
        %v708 = vextract.low.u32 %v707
        %v709 = vextract.high.u32 %v707
        %v710 = vmul.u32 %v703, %v694
        %v711 = vadd.s32 %v706, %v708
        %vm712 = vc.u32 %v706, %v708
        %v713 = vadd.s32 %v709, 1
        %v714 = vsel %vm712, %v713, %v709
        %v715 = vadd.s32 %v710, %v714
        %v716 = vadd.s32 %v715, 536870912
        %v717 = vshrl.u32 %v716, 30
        %v718 = vshll.u32 %v717, 30
        %v719 = vsub.s32 %v715, %v718
        %vm720 = vcmp.lt.s32.totalorder %v719, 0
        %v721 = vsub.s32 0, %v719
        %v722 = vsel %vm720, %v721, %v719
        %v723 = vclz %v722
        %v724 = vsub.s32 %v723, 2
        %vm725 = vcmp.gt.s32.totalorder 0, %v724
        %v726 = vsel %vm725, 0, %v724
        %v727 = vsub.s32 32, %v726
        %v728 = vshll.u32 %v719, %v726
        %v729 = vshrl.u32 %v711, %v727
        %v730 = vor.u32 %v728, %v729
        %v731 = vsub.s32 4294967266, %v726
        %v732 = vadd.s32 %v731, 127
        %v733 = vshll.u32 %v732, 23
        %v734 = vor.u32 4788187, %v733
        %v735 = vand.u32 2147483647, %v734
        %v737 = vcvt.s32.f32 %v730
        %v738 = vmul.f32 %v737, %v735
        %v739 = vxor.u32 %v738, 2147483648
        %v740 = vsel %vm657, %v739, %v738
        %v741 = vsub.s32 4, %v717
        %v742 = vsel %vm657, %v741, %v717
        %v743 = vsel %vm656, %v318, %v740
        %v744 = vsel %vm656, 0, %v742
        %v745 = vcosq.f32.pop %v743
        %v746 = vsinq.f32.pop %v743
        %vm747 = vweird.f32 %v318
        %v748 = vadd.s32 %v744, 3
        %v749 = vand.u32 %v748, 3
        %vm750 = vcmp.lt.s32.totalorder %v749, 2
        %vm751 = vcmp.eq.s32.totalorder %v749, 0
        %v752 = vxor.u32 %v746, 2147483648
        %v753 = vsel %vm751, %v745, %v752
        %vm754 = vcmp.eq.s32.totalorder %v749, 2
        %v755 = vxor.u32 %v745, 2147483648
        %v756 = vsel %vm754, %v755, %v746
        %v757 = vsel %vm750, %v753, %v756
        %v758 = vsel %vm747, nan, %v757
        %v759 = vand.u32 2147483647, %v323
        %vm760 = vcmp.le.f32.partialorder %v759, 0.7853982
        %vm761 = vcmp.lt.s32.totalorder %v323, 0
        %v762 = vand.u32 %v323, 2139095040
        %v763 = vshrl.u32 %v762, 23
        %v764 = vsub.s32 %v763, 127
        %v765 = vand.u32 2147483647, %v323
        %v766 = vand.u32 %v765, 8388607
        %v767 = vor.u32 %v766, 8388608
        %v768 = vsub.s32 0, %v767
        %v769 = vadd.s32 %v764, 1
        %vm770 = vcmp.gt.s32.totalorder %v769, 0
        %v771 = vsel %vm770, %v769, 0
        %v772 = vshrl.u32 %v771, 5
        %v773 = vand.u32 %v771, 31
        %v774 = vsub.s32 32, %v773
        %v775 = vshrl.u32 683565275, %v774
        %v776 = vshll.u32 683565275, %v773
        %v777 = vshrl.u32 2475754826, %v774
        %v778 = vor.u32 %v776, %v777
        %v779 = vshll.u32 2475754826, %v773
        %v780 = vshrl.u32 2131351028, %v774
        %v781 = vor.u32 %v779, %v780
        %v782 = vshll.u32 2131351028, %v773
        %v783 = vshrl.u32 2102212464, %v774
        %v784 = vor.u32 %v782, %v783
        %v785 = vshll.u32 2102212464, %v773
        %v786 = vshrl.u32 920167782, %v774
        %v787 = vor.u32 %v785, %v786
        %v788 = vshll.u32 920167782, %v773
        %v789 = vshrl.u32 1326507024, %v774
        %v790 = vor.u32 %v788, %v789
        %vm791 = vcmp.lt.s32.totalorder %v772, 1
        %vm792 = vcmp.lt.s32.totalorder %v772, 2
        %vm793 = vcmp.lt.s32.totalorder %v772, 3
        %vm794 = vcmp.lt.s32.totalorder %v772, 4
        %v795 = vsel %vm791, %v775, %v778
        %v796 = vsel %vm794, %v784, 2102212464
        %v797 = vsel %vm793, %v781, %v796
        %v798 = vsel %vm792, %v795, %v797
        %v799 = vsel %vm791, %v778, %v781
        %v800 = vsel %vm794, %v787, 920167782
        %v801 = vsel %vm793, %v784, %v800
        %v802 = vsel %vm792, %v799, %v801
        %v803 = vsel %vm791, %v781, %v784
        %v804 = vsel %vm794, %v790, 1326507024
        %v805 = vsel %vm793, %v787, %v804
        %v806 = vsel %vm792, %v803, %v805
        %v807 = vshll.u32 %v767, 8
        %v808 = vmul.u32.u64.compose %v807, %v806
        %v809 = vextract.low.u32 %v808
        %v810 = vextract.high.u32 %v808
        %v811 = vmul.u32.u64.compose %v807, %v802
        %v812 = vextract.low.u32 %v811
        %v813 = vextract.high.u32 %v811
        %v814 = vmul.u32 %v807, %v798
        %v815 = vadd.s32 %v810, %v812
        %vm816 = vc.u32 %v810, %v812
        %v817 = vadd.s32 %v813, 1
        %v818 = vsel %vm816, %v817, %v813
        %v819 = vadd.s32 %v814, %v818
        %v820 = vadd.s32 %v819, 536870912
        %v821 = vshrl.u32 %v820, 30
        %v822 = vshll.u32 %v821, 30
        %v823 = vsub.s32 %v819, %v822
        %vm824 = vcmp.lt.s32.totalorder %v823, 0
        %v825 = vsub.s32 0, %v823
        %v826 = vsel %vm824, %v825, %v823
        %v827 = vclz %v826
        %v828 = vsub.s32 %v827, 2
        %vm829 = vcmp.gt.s32.totalorder 0, %v828
        %v830 = vsel %vm829, 0, %v828
        %v831 = vsub.s32 32, %v830
        %v832 = vshll.u32 %v823, %v830
        %v833 = vshrl.u32 %v815, %v831
        %v834 = vor.u32 %v832, %v833
        %v835 = vsub.s32 4294967266, %v830
        %v836 = vadd.s32 %v835, 127
        %v837 = vshll.u32 %v836, 23
        %v838 = vor.u32 4788187, %v837
        %v839 = vand.u32 2147483647, %v838
        %v841 = vcvt.s32.f32 %v834
        %v842 = vmul.f32 %v841, %v839
        %v843 = vxor.u32 %v842, 2147483648
        %v844 = vsel %vm761, %v843, %v842
        %v845 = vsub.s32 4, %v821
        %v846 = vsel %vm761, %v845, %v821
        %v847 = vsel %vm760, %v323, %v844
        %v848 = vsel %vm760, 0, %v846
        %v849 = vcosq.f32.pop %v847
        %v850 = vsinq.f32.pop %v847
        %vm851 = vweird.f32 %v323
        %v852 = vadd.s32 %v848, 3
        %v853 = vand.u32 %v852, 3
        %vm854 = vcmp.lt.s32.totalorder %v853, 2
        %vm855 = vcmp.eq.s32.totalorder %v853, 0
        %v856 = vxor.u32 %v850, 2147483648
        %v857 = vsel %vm855, %v849, %v856
        %vm858 = vcmp.eq.s32.totalorder %v853, 2
        %v859 = vxor.u32 %v849, 2147483648
        %v860 = vsel %vm858, %v859, %v850
        %v861 = vsel %vm854, %v857, %v860
        %v862 = vsel %vm851, nan, %v861
        %v863 = vand.u32 2147483647, %v328
        %vm864 = vcmp.le.f32.partialorder %v863, 0.7853982
        %vm865 = vcmp.lt.s32.totalorder %v328, 0
        %v866 = vand.u32 %v328, 2139095040
        %v867 = vshrl.u32 %v866, 23
        %v868 = vsub.s32 %v867, 127
        %v869 = vand.u32 2147483647, %v328
        %v870 = vand.u32 %v869, 8388607
        %v871 = vor.u32 %v870, 8388608
        %v872 = vsub.s32 0, %v871
        %v873 = vadd.s32 %v868, 1
        %vm874 = vcmp.gt.s32.totalorder %v873, 0
        %v875 = vsel %vm874, %v873, 0
        %v876 = vshrl.u32 %v875, 5
        %v877 = vand.u32 %v875, 31
        %v878 = vsub.s32 32, %v877
        %v879 = vshrl.u32 683565275, %v878
        %v880 = vshll.u32 683565275, %v877
        %v881 = vshrl.u32 2475754826, %v878
        %v882 = vor.u32 %v880, %v881
        %v883 = vshll.u32 2475754826, %v877
        %v884 = vshrl.u32 2131351028, %v878
        %v885 = vor.u32 %v883, %v884
        %v886 = vshll.u32 2131351028, %v877
        %v887 = vshrl.u32 2102212464, %v878
        %v888 = vor.u32 %v886, %v887
        %v889 = vshll.u32 2102212464, %v877
        %v890 = vshrl.u32 920167782, %v878
        %v891 = vor.u32 %v889, %v890
        %v892 = vshll.u32 920167782, %v877
        %v893 = vshrl.u32 1326507024, %v878
        %v894 = vor.u32 %v892, %v893
        %vm895 = vcmp.lt.s32.totalorder %v876, 1
        %vm896 = vcmp.lt.s32.totalorder %v876, 2
        %vm897 = vcmp.lt.s32.totalorder %v876, 3
        %vm898 = vcmp.lt.s32.totalorder %v876, 4
        %v899 = vsel %vm895, %v879, %v882
        %v900 = vsel %vm898, %v888, 2102212464
        %v901 = vsel %vm897, %v885, %v900
        %v902 = vsel %vm896, %v899, %v901
        %v903 = vsel %vm895, %v882, %v885
        %v904 = vsel %vm898, %v891, 920167782
        %v905 = vsel %vm897, %v888, %v904
        %v906 = vsel %vm896, %v903, %v905
        %v907 = vsel %vm895, %v885, %v888
        %v908 = vsel %vm898, %v894, 1326507024
        %v909 = vsel %vm897, %v891, %v908
        %v910 = vsel %vm896, %v907, %v909
        %v911 = vshll.u32 %v871, 8
        %v912 = vmul.u32.u64.compose %v911, %v910
        %v913 = vextract.low.u32 %v912
        %v914 = vextract.high.u32 %v912
        %v915 = vmul.u32.u64.compose %v911, %v906
        %v916 = vextract.low.u32 %v915
        %v917 = vextract.high.u32 %v915
        %v918 = vmul.u32 %v911, %v902
        %v919 = vadd.s32 %v914, %v916
        %vm920 = vc.u32 %v914, %v916
        %v921 = vadd.s32 %v917, 1
        %v922 = vsel %vm920, %v921, %v917
        %v923 = vadd.s32 %v918, %v922
        %v924 = vadd.s32 %v923, 536870912
        %v925 = vshrl.u32 %v924, 30
        %v926 = vshll.u32 %v925, 30
        %v927 = vsub.s32 %v923, %v926
        %vm928 = vcmp.lt.s32.totalorder %v927, 0
        %v929 = vsub.s32 0, %v927
        %v930 = vsel %vm928, %v929, %v927
        %v931 = vclz %v930
        %v932 = vsub.s32 %v931, 2
        %vm933 = vcmp.gt.s32.totalorder 0, %v932
        %v934 = vsel %vm933, 0, %v932
        %v935 = vsub.s32 32, %v934
        %v936 = vshll.u32 %v927, %v934
        %v937 = vshrl.u32 %v919, %v935
        %v938 = vor.u32 %v936, %v937
        %v939 = vsub.s32 4294967266, %v934
        %v940 = vadd.s32 %v939, 127
        %v941 = vshll.u32 %v940, 23
        %v942 = vor.u32 4788187, %v941
        %v943 = vand.u32 2147483647, %v942
        %v945 = vcvt.s32.f32 %v938
        %v946 = vmul.f32 %v945, %v943
        %v947 = vxor.u32 %v946, 2147483648
        %v948 = vsel %vm865, %v947, %v946
        %v949 = vsub.s32 4, %v925
        %v950 = vsel %vm865, %v949, %v925
        %v951 = vsel %vm864, %v328, %v948
        %v952 = vsel %vm864, 0, %v950
        %v953 = vcosq.f32.pop %v951
        %v954 = vsinq.f32.pop %v951
        %vm955 = vweird.f32 %v328
        %v956 = vadd.s32 %v952, 3
        %v957 = vand.u32 %v956, 3
        %vm958 = vcmp.lt.s32.totalorder %v957, 2
        %vm959 = vcmp.eq.s32.totalorder %v957, 0
        %v960 = vxor.u32 %v954, 2147483648
        %v961 = vsel %vm959, %v953, %v960
        %vm962 = vcmp.eq.s32.totalorder %v957, 2
        %v963 = vxor.u32 %v953, 2147483648
        %v964 = vsel %vm962, %v963, %v954
        %v965 = vsel %vm958, %v961, %v964
        %v966 = vsel %vm955, nan, %v965
        %v967 = vand.u32 2147483647, %v333
        %vm968 = vcmp.le.f32.partialorder %v967, 0.7853982
        %vm969 = vcmp.lt.s32.totalorder %v333, 0
        %v970 = vand.u32 %v333, 2139095040
        %v971 = vshrl.u32 %v970, 23
        %v972 = vsub.s32 %v971, 127
        %v973 = vand.u32 2147483647, %v333
        %v974 = vand.u32 %v973, 8388607
        %v975 = vor.u32 %v974, 8388608
        %v976 = vsub.s32 0, %v975
        %v977 = vadd.s32 %v972, 1
        %vm978 = vcmp.gt.s32.totalorder %v977, 0
        %v979 = vsel %vm978, %v977, 0
        %v980 = vshrl.u32 %v979, 5
        %v981 = vand.u32 %v979, 31
        %v982 = vsub.s32 32, %v981
        %v983 = vshrl.u32 683565275, %v982
        %v984 = vshll.u32 683565275, %v981
        %v985 = vshrl.u32 2475754826, %v982
        %v986 = vor.u32 %v984, %v985
        %v987 = vshll.u32 2475754826, %v981
        %v988 = vshrl.u32 2131351028, %v982
        %v989 = vor.u32 %v987, %v988
        %v990 = vshll.u32 2131351028, %v981
        %v991 = vshrl.u32 2102212464, %v982
        %v992 = vor.u32 %v990, %v991
        %v993 = vshll.u32 2102212464, %v981
        %v994 = vshrl.u32 920167782, %v982
        %v995 = vor.u32 %v993, %v994
        %v996 = vshll.u32 920167782, %v981
        %v997 = vshrl.u32 1326507024, %v982
        %v998 = vor.u32 %v996, %v997
        %vm999 = vcmp.lt.s32.totalorder %v980, 1
        %vm1000 = vcmp.lt.s32.totalorder %v980, 2
        %vm1001 = vcmp.lt.s32.totalorder %v980, 3
        %vm1002 = vcmp.lt.s32.totalorder %v980, 4
        %v1003 = vsel %vm999, %v983, %v986
        %v1004 = vsel %vm1002, %v992, 2102212464
        %v1005 = vsel %vm1001, %v989, %v1004
        %v1006 = vsel %vm1000, %v1003, %v1005
        %v1007 = vsel %vm999, %v986, %v989
        %v1008 = vsel %vm1002, %v995, 920167782
        %v1009 = vsel %vm1001, %v992, %v1008
        %v1010 = vsel %vm1000, %v1007, %v1009
        %v1011 = vsel %vm999, %v989, %v992
        %v1012 = vsel %vm1002, %v998, 1326507024
        %v1013 = vsel %vm1001, %v995, %v1012
        %v1014 = vsel %vm1000, %v1011, %v1013
        %v1015 = vshll.u32 %v975, 8
        %v1016 = vmul.u32.u64.compose %v1015, %v1014
        %v1017 = vextract.low.u32 %v1016
        %v1018 = vextract.high.u32 %v1016
        %v1019 = vmul.u32.u64.compose %v1015, %v1010
        %v1020 = vextract.low.u32 %v1019
        %v1021 = vextract.high.u32 %v1019
        %v1022 = vmul.u32 %v1015, %v1006
        %v1023 = vadd.s32 %v1018, %v1020
        %vm1024 = vc.u32 %v1018, %v1020
        %v1025 = vadd.s32 %v1021, 1
        %v1026 = vsel %vm1024, %v1025, %v1021
        %v1027 = vadd.s32 %v1022, %v1026
        %v1028 = vadd.s32 %v1027, 536870912
        %v1029 = vshrl.u32 %v1028, 30
        %v1030 = vshll.u32 %v1029, 30
        %v1031 = vsub.s32 %v1027, %v1030
        %vm1032 = vcmp.lt.s32.totalorder %v1031, 0
        %v1033 = vsub.s32 0, %v1031
        %v1034 = vsel %vm1032, %v1033, %v1031
        %v1035 = vclz %v1034
        %v1036 = vsub.s32 %v1035, 2
        %vm1037 = vcmp.gt.s32.totalorder 0, %v1036
        %v1038 = vsel %vm1037, 0, %v1036
        %v1039 = vsub.s32 32, %v1038
        %v1040 = vshll.u32 %v1031, %v1038
        %v1041 = vshrl.u32 %v1023, %v1039
        %v1042 = vor.u32 %v1040, %v1041
        %v1043 = vsub.s32 4294967266, %v1038
        %v1044 = vadd.s32 %v1043, 127
        %v1045 = vshll.u32 %v1044, 23
        %v1046 = vor.u32 4788187, %v1045
        %v1047 = vand.u32 2147483647, %v1046
        %v1049 = vcvt.s32.f32 %v1042
        %v1050 = vmul.f32 %v1049, %v1047
        %v1051 = vxor.u32 %v1050, 2147483648
        %v1052 = vsel %vm969, %v1051, %v1050
        %v1053 = vsub.s32 4, %v1029
        %v1054 = vsel %vm969, %v1053, %v1029
        %v1055 = vsel %vm968, %v333, %v1052
        %v1056 = vsel %vm968, 0, %v1054
        %v1057 = vcosq.f32.pop %v1055
        %v1058 = vsinq.f32.pop %v1055
        %vm1059 = vweird.f32 %v333
        %v1060 = vadd.s32 %v1056, 3
        %v1061 = vand.u32 %v1060, 3
        %vm1062 = vcmp.lt.s32.totalorder %v1061, 2
        %vm1063 = vcmp.eq.s32.totalorder %v1061, 0
        %v1064 = vxor.u32 %v1058, 2147483648
        %v1065 = vsel %vm1063, %v1057, %v1064
        %vm1066 = vcmp.eq.s32.totalorder %v1061, 2
        %v1067 = vxor.u32 %v1057, 2147483648
        %v1068 = vsel %vm1066, %v1067, %v1058
        %v1069 = vsel %vm1062, %v1065, %v1068
        %v1070 = vsel %vm1059, nan, %v1069
        %v1071 = vand.u32 2147483647, %v338
        %vm1072 = vcmp.le.f32.partialorder %v1071, 0.7853982
        %vm1073 = vcmp.lt.s32.totalorder %v338, 0
        %v1074 = vand.u32 %v338, 2139095040
        %v1075 = vshrl.u32 %v1074, 23
        %v1076 = vsub.s32 %v1075, 127
        %v1077 = vand.u32 2147483647, %v338
        %v1078 = vand.u32 %v1077, 8388607
        %v1079 = vor.u32 %v1078, 8388608
        %v1080 = vsub.s32 0, %v1079
        %v1081 = vadd.s32 %v1076, 1
        %vm1082 = vcmp.gt.s32.totalorder %v1081, 0
        %v1083 = vsel %vm1082, %v1081, 0
        %v1084 = vshrl.u32 %v1083, 5
        %v1085 = vand.u32 %v1083, 31
        %v1086 = vsub.s32 32, %v1085
        %v1087 = vshrl.u32 683565275, %v1086
        %v1088 = vshll.u32 683565275, %v1085
        %v1089 = vshrl.u32 2475754826, %v1086
        %v1090 = vor.u32 %v1088, %v1089
        %v1091 = vshll.u32 2475754826, %v1085
        %v1092 = vshrl.u32 2131351028, %v1086
        %v1093 = vor.u32 %v1091, %v1092
        %v1094 = vshll.u32 2131351028, %v1085
        %v1095 = vshrl.u32 2102212464, %v1086
        %v1096 = vor.u32 %v1094, %v1095
        %v1097 = vshll.u32 2102212464, %v1085
        %v1098 = vshrl.u32 920167782, %v1086
        %v1099 = vor.u32 %v1097, %v1098
        %v1100 = vshll.u32 920167782, %v1085
        %v1101 = vshrl.u32 1326507024, %v1086
        %v1102 = vor.u32 %v1100, %v1101
        %vm1103 = vcmp.lt.s32.totalorder %v1084, 1
        %vm1104 = vcmp.lt.s32.totalorder %v1084, 2
        %vm1105 = vcmp.lt.s32.totalorder %v1084, 3
        %vm1106 = vcmp.lt.s32.totalorder %v1084, 4
        %v1107 = vsel %vm1103, %v1087, %v1090
        %v1108 = vsel %vm1106, %v1096, 2102212464
        %v1109 = vsel %vm1105, %v1093, %v1108
        %v1110 = vsel %vm1104, %v1107, %v1109
        %v1111 = vsel %vm1103, %v1090, %v1093
        %v1112 = vsel %vm1106, %v1099, 920167782
        %v1113 = vsel %vm1105, %v1096, %v1112
        %v1114 = vsel %vm1104, %v1111, %v1113
        %v1115 = vsel %vm1103, %v1093, %v1096
        %v1116 = vsel %vm1106, %v1102, 1326507024
        %v1117 = vsel %vm1105, %v1099, %v1116
        %v1118 = vsel %vm1104, %v1115, %v1117
        %v1119 = vshll.u32 %v1079, 8
        %v1120 = vmul.u32.u64.compose %v1119, %v1118
        %v1121 = vextract.low.u32 %v1120
        %v1122 = vextract.high.u32 %v1120
        %v1123 = vmul.u32.u64.compose %v1119, %v1114
        %v1124 = vextract.low.u32 %v1123
        %v1125 = vextract.high.u32 %v1123
        %v1126 = vmul.u32 %v1119, %v1110
        %v1127 = vadd.s32 %v1122, %v1124
        %vm1128 = vc.u32 %v1122, %v1124
        %v1129 = vadd.s32 %v1125, 1
        %v1130 = vsel %vm1128, %v1129, %v1125
        %v1131 = vadd.s32 %v1126, %v1130
        %v1132 = vadd.s32 %v1131, 536870912
        %v1133 = vshrl.u32 %v1132, 30
        %v1134 = vshll.u32 %v1133, 30
        %v1135 = vsub.s32 %v1131, %v1134
        %vm1136 = vcmp.lt.s32.totalorder %v1135, 0
        %v1137 = vsub.s32 0, %v1135
        %v1138 = vsel %vm1136, %v1137, %v1135
        %v1139 = vclz %v1138
        %v1140 = vsub.s32 %v1139, 2
        %vm1141 = vcmp.gt.s32.totalorder 0, %v1140
        %v1142 = vsel %vm1141, 0, %v1140
        %v1143 = vsub.s32 32, %v1142
        %v1144 = vshll.u32 %v1135, %v1142
        %v1145 = vshrl.u32 %v1127, %v1143
        %v1146 = vor.u32 %v1144, %v1145
        %v1147 = vsub.s32 4294967266, %v1142
        %v1148 = vadd.s32 %v1147, 127
        %v1149 = vshll.u32 %v1148, 23
        %v1150 = vor.u32 4788187, %v1149
        %v1151 = vand.u32 2147483647, %v1150
        %v1153 = vcvt.s32.f32 %v1146
        %v1154 = vmul.f32 %v1153, %v1151
        %v1155 = vxor.u32 %v1154, 2147483648
        %v1156 = vsel %vm1073, %v1155, %v1154
        %v1157 = vsub.s32 4, %v1133
        %v1158 = vsel %vm1073, %v1157, %v1133
        %v1159 = vsel %vm1072, %v338, %v1156
        %v1160 = vsel %vm1072, 0, %v1158
        %v1161 = vcosq.f32.pop %v1159
        %v1162 = vsinq.f32.pop %v1159
        %vm1163 = vweird.f32 %v338
        %v1164 = vadd.s32 %v1160, 3
        %v1165 = vand.u32 %v1164, 3
        %vm1166 = vcmp.lt.s32.totalorder %v1165, 2
        %vm1167 = vcmp.eq.s32.totalorder %v1165, 0
        %v1168 = vxor.u32 %v1162, 2147483648
        %v1169 = vsel %vm1167, %v1161, %v1168
        %vm1170 = vcmp.eq.s32.totalorder %v1165, 2
        %v1171 = vxor.u32 %v1161, 2147483648
        %v1172 = vsel %vm1170, %v1171, %v1162
        %v1173 = vsel %vm1166, %v1169, %v1172
        %v1174 = vsel %vm1163, nan, %v1173
        %v1175 = vsel %vm342, 1, 0
        %v1176 = vlaneseq
        %v1177 = vshrl.u32 %v1176, 7
        %v1178 = vsub.s32 0, %v1177
        %v1179 = vrot.slane %v1175, %v1178
        %vm1180 = vcmp.eq.s32.totalorder %v1179, 1
        %v1181 = vsel %vm1180, %v303, %v446
        %v1182 = vsel %vm1180, %v308, %v550
        %v1183 = vsel %vm1180, %v313, %v654
        %v1184 = vsel %vm1180, %v318, %v758
        %v1185 = vsel %vm1180, %v323, %v862
        %v1186 = vsel %vm1180, %v328, %v966
        %v1187 = vsel %vm1180, %v333, %v1070
        %v1188 = vsel %vm1180, %v338, %v1174
        %1189 = vst [vmem:[%s188] sm:$0xff] %v1181
        %1190 = vst [vmem:[%s188 + $0x8] sm:$0xff] %v1182
        %1191 = vst [vmem:[%s188 + $0x10] sm:$0xff] %v1183
        %1192 = vst [vmem:[%s188 + $0x18] sm:$0xff] %v1184
        %1193 = vst [vmem:[%s188 + $0x20] sm:$0xff] %v1185
        %1194 = vst [vmem:[%s188 + $0x28] sm:$0xff] %v1186
        %1195 = vst [vmem:[%s188 + $0x30] sm:$0xff] %v1187
        %1196 = vst [vmem:[%s188 + $0x38] sm:$0xff] %v1188
        %s1197 = scalar_lea.vmem %s188, 64 [#allocation2]
        %1198 = vst [vmem:[%s1197] sm:$0xff] %v1181
        %1199 = vst [vmem:[%s1197 + $0x8] sm:$0xff] %v1182
        %1200 = vst [vmem:[%s1197 + $0x10] sm:$0xff] %v1183
        %1201 = vst [vmem:[%s1197 + $0x18] sm:$0xff] %v1184
        %1202 = vst [vmem:[%s1197 + $0x20] sm:$0xff] %v1185
        %1203 = vst [vmem:[%s1197 + $0x28] sm:$0xff] %v1186
        %1204 = vst [vmem:[%s1197 + $0x30] sm:$0xff] %v1187
        %1205 = vst [vmem:[%s1197 + $0x38] sm:$0xff] %v1188
        %s1206 = scalar_lea.vmem %s188, 128 [#allocation2]
        %1207 = vst [vmem:[%s1206] sm:$0xff] %v1181
        %1208 = vst [vmem:[%s1206 + $0x8] sm:$0xff] %v1182
        %1209 = vst [vmem:[%s1206 + $0x10] sm:$0xff] %v1183
        %1210 = vst [vmem:[%s1206 + $0x18] sm:$0xff] %v1184
        %1211 = vst [vmem:[%s1206 + $0x20] sm:$0xff] %v1185
        %1212 = vst [vmem:[%s1206 + $0x28] sm:$0xff] %v1186
        %1213 = vst [vmem:[%s1206 + $0x30] sm:$0xff] %v1187
        %1214 = vst [vmem:[%s1206 + $0x38] sm:$0xff] %v1188
        %s1215 = scalar_lea.vmem %s188, 192 [#allocation2]
        %1216 = vst [vmem:[%s1215] sm:$0xff] %v1181
        %1217 = vst [vmem:[%s1215 + $0x8] sm:$0xff] %v1182
        %1218 = vst [vmem:[%s1215 + $0x10] sm:$0xff] %v1183
        %1219 = vst [vmem:[%s1215 + $0x18] sm:$0xff] %v1184
        %1220 = vst [vmem:[%s1215 + $0x20] sm:$0xff] %v1185
        %1221 = vst [vmem:[%s1215 + $0x28] sm:$0xff] %v1186
        %1222 = vst [vmem:[%s1215 + $0x30] sm:$0xff] %v1187
        %1223 = vst [vmem:[%s1215 + $0x38] sm:$0xff] %v1188
        %s1224 = sand.u32 %s109, 1
        %s1225 = scalar_lea.sflag [#allocation3], %s1224
        %s1226 = sand.u32 %s109, 1
        %s1227 = smul.addr %s1226, 256
        %s1228 = scalar_lea.vmem [#allocation2], %s1227
        // Predicated region
        $region33: #{tpu_custom_call.1} parent=31 // pred_check
          %p1229 = pneg %p119
        $region34: #{tpu_custom_call.1} parent=31 // pred_check_branch
          %1231 = sbr.rel (%p1229) target = $region36
        $region35: #{tpu_custom_call.1} parent=31 // pred_region
          %s1232 = smul.u32 8, %s22
          %s1234 = ssub.s32 4096, 4096
          %1235 = vsyncadd %s1225, %s1234
          %s1236 = smul.addr %s21, 32
          %s1237 = sadd.s32 %s1232, %s1236
          %s1238 = smul.addr %s1237, 128
          %s1239 = scalar_lea.hbm %s3, %s1238
          %s1240 = sshll.u32 %s1228, 4
          %s1241 = int_to_ptr.vmem [resolvable:$true] %s1240
          %1246 = dma.vmem_to_hbm [thread:$0]  %s1241, 4096, %s1239, %s1225, 128, 128, 8
        $region36: #{tpu_custom_call.1} parent=31 // pred_fallthru
          _
      $region32: #{tpu_custom_call.1} parent=5 // pred_fallthru
        _
      %p1247 = scmp.le.s32.totalorder 2, %s12
      // Predicated region
      $region37: #{tpu_custom_call.1} parent=5 // pred_check
        %p1248 = pneg %p1247
      $region38: #{tpu_custom_call.1} parent=5 // pred_check_branch
        %1250 = sbr.rel (%p1248) target = $region40
      $region39: #{tpu_custom_call.1} parent=5 // pred_region
        %s1251 = ssub.s32 %s12, 2
        // Predicated region
        $region41: #{tpu_custom_call.1} parent=39 // pred_check
          %p1252 = pneg %p125
        $region42: #{tpu_custom_call.1} parent=39 // pred_check_branch
          %1254 = sbr.rel (%p1252) target = $region44
        $region43: #{tpu_custom_call.1} parent=39 // pred_region
          %s1255 = sand.u32 %s110, 1
          %s1256 = scalar_lea.sflag [#allocation3], %s1255
          %s1257 = sand.u32 %s110, 1
          %s1258 = smul.addr %s1257, 256
          %s1259 = scalar_lea.vmem [#allocation2], %s1258
          %1260 = dma.done %s1256, 4096
        $region44: #{tpu_custom_call.1} parent=39 // pred_fallthru
          _
      $region40: #{tpu_custom_call.1} parent=5 // pred_fallthru
        _
    $region6: #{tpu_custom_call.1} parent=1 // loop_footer
      %s16 = sadd.s32 1, %s12
    $region7: #{tpu_custom_call.1} parent=1 // loop_footer_branch
      %11 = sbr.rel target = $region3
    $region8: #{tpu_custom_call.1} parent=1 // loop_exit
      _
    %1261 = vsyncpa [#allocation3], 1
    %s1262 = scalar_lea.sflag [#allocation3], 1
    %1263 = vsyncpa %s1262, 1

</llo_original>
